<compile_context>
chip_gen: v7x
topology: tpu7x:2x2x1
jax: 0.10.0
libtpu: 0.0.40
codegen_flags: <defaults>
</compile_context>

<pallas_src>
import functools

import jax
import jax.numpy as jnp
from jax.experimental import pallas as pl
from jax.experimental.pallas import tpu as pltpu


def mixprop_kernel(x_ref, abig_ref, w_ref, b_ref, o_ref, *, gdep, alpha):
    """One grid step = one batch element.

    x_ref:    [C, V*L]            input slab (lane-dense, L fastest)
    abig_ref: [V*L, V*L]          kron(row-normalized adj, I_L)
    w_ref:    [gdep+1, c_out, C]  1x1-conv weight, hop-major leading axis
    b_ref:    [c_out, 1]          bias
    o_ref:    [c_out, V*L]        output slab (lane-dense)
    """
    x = x_ref[...]                               # [C, V*L], f32
    abig = abig_ref[...]                         # [V*L, V*L], f32

    h = x
    # Hop 0 contribution of the fused 1x1 conv: W_0 @ h0.
    acc = jnp.dot(w_ref[0], h, preferred_element_type=jnp.float32)

    for k in range(1, gdep + 1):
        # Graph propagation over V with L kept on lanes:
        #   hp[c, w*L+l] = sum_v h[c, v*L+l] * a[v, w]
        hp = jnp.dot(h, abig, preferred_element_type=jnp.float32)
        h = alpha * x + (1.0 - alpha) * hp       # f32 elementwise (VPU)
        acc = acc + jnp.dot(w_ref[k], h, preferred_element_type=jnp.float32)

    o_ref[...] = (acc + b_ref[...]).astype(o_ref.dtype)


def mixprop_pallas(x_nchw, adj, W, b, *, gdep, alpha):
    """x_nchw: [N, C, V, L], adj: [V, V], W: [c_out, (gdep+1)*C], b: [c_out]."""
    N, C, V, L = x_nchw.shape
    c_out = W.shape[0]
    VL = V * L

    # --- hoisted, tiny preprocessing (plain JAX, runs once, not per grid step)
    a = adj + jnp.eye(V, dtype=adj.dtype)
    a = a / jnp.sum(a, axis=1, keepdims=True)                 # row-normalized
    a_big = jnp.kron(a, jnp.eye(L, dtype=a.dtype))            # [V*L, V*L]

    x2 = x_nchw.reshape(N, C, VL)                             # free bitcast
    # W[o, k*C + c] -> w3[k, o, c]  (leading-axis hop index inside the kernel)
    w3 = W.reshape(c_out, gdep + 1, C).transpose(1, 0, 2)
    b2 = b.reshape(c_out, 1)

    kernel = functools.partial(mixprop_kernel, gdep=gdep, alpha=alpha)
    out2 = pl.pallas_call(
        kernel,
        out_shape=jax.ShapeDtypeStruct((N, c_out, VL), x_nchw.dtype),
        grid=(N,),
        in_specs=[
            pl.BlockSpec((None, C, VL), lambda n: (n, 0, 0)),
            pl.BlockSpec((VL, VL), lambda n: (0, 0)),
            pl.BlockSpec((gdep + 1, c_out, C), lambda n: (0, 0, 0)),
            pl.BlockSpec((c_out, 1), lambda n: (0, 0)),
        ],
        out_specs=pl.BlockSpec((None, c_out, VL), lambda n: (n, 0, 0)),
        compiler_params=pltpu.CompilerParams(
            dimension_semantics=("parallel",)),
    )(x2, a_big, w3, b2)

    return out2.reshape(N, c_out, V, L)                       # free bitcast


def mixprop_ref(x, adj, W, b, *, gdep, alpha):
    """Plain-JAX reference mirroring the PyTorch module."""
    V = adj.shape[0]
    adj = adj + jnp.eye(V, dtype=adj.dtype)
    d = adj.sum(axis=1)
    a = adj / d[:, None]
    h = x
    out = [h]
    for _ in range(gdep):
        h = alpha * x + (1.0 - alpha) * jnp.einsum('ncvl,vw->ncwl', h, a)
        out.append(h)
    ho = jnp.concatenate(out, axis=1)                 # [N, (gdep+1)*C, V, L]
    return jnp.einsum('oi,nivl->novl', W, ho) + b[None, :, None, None]


if __name__ == "__main__":
    # Small shapes consistent with the module's forward: x is NCHW = [N, C, V, L].
    N, C, V, L = 2, 4, 16, 8
    c_out, gdep, alpha = 8, 2, 0.05

    key = jax.random.PRNGKey(0)
    kx, ka, kw, kb = jax.random.split(key, 4)

    x = jax.random.normal(kx, (N, C, V, L), dtype=jnp.float32)
    adj = jax.random.uniform(ka, (V, V), dtype=jnp.float32)          # non-negative
    # Conv2d((gdep+1)*C -> c_out, kernel=1, bias=True) parameters.
    W = jax.random.normal(kw, (c_out, (gdep + 1) * C), dtype=jnp.float32) * 0.1
    b = jax.random.normal(kb, (c_out,), dtype=jnp.float32) * 0.1

    fn = jax.jit(functools.partial(mixprop_pallas, gdep=gdep, alpha=alpha))
    out = jax.block_until_ready(fn(x, adj, W, b))

    ref = mixprop_ref(x, adj, W, b, gdep=gdep, alpha=alpha)
    assert out.shape == (N, c_out, V, L)
    assert jnp.allclose(out, ref, atol=1e-4, rtol=1e-4), float(jnp.abs(out - ref).max())

    print("KERNEL_OK")
</pallas_src>

<mosaic_0001>
module attributes {stable_mosaic.version = 11 : i64} {
  func.func @mixprop_kernel(%arg0: i32, %arg1: memref<1x4x128xf32, #tpu.memory_space<vmem>>, %arg2: memref<128x128xf32, #tpu.memory_space<vmem>>, %arg3: memref<3x8x4xf32, #tpu.memory_space<vmem>>, %arg4: memref<8x1xf32, #tpu.memory_space<vmem>>, %arg5: memref<1x8x128xf32, #tpu.memory_space<vmem>>) attributes {dimension_semantics = [#tpu.dimension_semantics<parallel>], iteration_bounds = array<i64: 2>, scalar_prefetch = 0 : i64, scratch_operands = 0 : i64, tpu.core_type = #tpu.core_type<tc>, window_params = [{transform_indices = @transform_0, window_bounds = array<i64: 1, 4, 128>}, {pipeline_mode = #tpu.pipeline_mode<synchronous>, transform_indices = @transform_1, window_bounds = array<i64: 128, 128>}, {pipeline_mode = #tpu.pipeline_mode<synchronous>, transform_indices = @transform_2, window_bounds = array<i64: 3, 8, 4>}, {pipeline_mode = #tpu.pipeline_mode<synchronous>, transform_indices = @transform_3, window_bounds = array<i64: 8, 1>}, {transform_indices = @transform_4, window_bounds = array<i64: 1, 8, 128>}]} {
    %c0 = arith.constant 0 : index
    %c0_0 = arith.constant 0 : index
    %c0_1 = arith.constant 0 : index
    %0 = vector.load %arg1[%c0, %c0_0, %c0_1] : memref<1x4x128xf32, #tpu.memory_space<vmem>>, vector<1x4x128xf32>
    %1 = vector.shape_cast %0 : vector<1x4x128xf32> to vector<4x128xf32>
    %c0_2 = arith.constant 0 : index
    %c0_3 = arith.constant 0 : index
    %2 = vector.load %arg2[%c0_2, %c0_3] : memref<128x128xf32, #tpu.memory_space<vmem>>, vector<128x128xf32>
    %c0_4 = arith.constant 0 : index
    %c0_5 = arith.constant 0 : index
    %c0_6 = arith.constant 0 : index
    %3 = vector.load %arg3[%c0_4, %c0_5, %c0_6] : memref<3x8x4xf32, #tpu.memory_space<vmem>>, vector<1x8x4xf32>
    %4 = vector.shape_cast %3 : vector<1x8x4xf32> to vector<8x4xf32>
    %cst = arith.constant dense<0.000000e+00> : vector<8x128xf32>
    %5 = tpu.matmul %4, %1, %cst {dimension_numbers = #tpu.dot_dimension_numbers<[1], [0], [0], [1], [0, 0, 1, 1], [], []>} : vector<8x4xf32>, vector<4x128xf32>, vector<8x128xf32> -> vector<8x128xf32>
    %cst_7 = arith.constant dense<0.000000e+00> : vector<4x128xf32>
    %6 = tpu.matmul %1, %2, %cst_7 {dimension_numbers = #tpu.dot_dimension_numbers<[1], [0], [0], [1], [0, 0, 1, 1], [], []>} : vector<4x128xf32>, vector<128x128xf32>, vector<4x128xf32> -> vector<4x128xf32>
    %cst_8 = arith.constant 5.000000e-02 : f32
    %7 = vector.broadcast %cst_8 : f32 to vector<4x128xf32>
    %8 = arith.mulf %7, %1 : vector<4x128xf32>
    %cst_9 = arith.constant 0.949999988 : f32
    %9 = vector.broadcast %cst_9 : f32 to vector<4x128xf32>
    %10 = arith.mulf %9, %6 : vector<4x128xf32>
    %11 = arith.addf %8, %10 : vector<4x128xf32>
    %c1 = arith.constant 1 : index
    %c0_10 = arith.constant 0 : index
    %c0_11 = arith.constant 0 : index
    %12 = vector.load %arg3[%c1, %c0_10, %c0_11] : memref<3x8x4xf32, #tpu.memory_space<vmem>>, vector<1x8x4xf32>
    %13 = vector.shape_cast %12 : vector<1x8x4xf32> to vector<8x4xf32>
    %cst_12 = arith.constant dense<0.000000e+00> : vector<8x128xf32>
    %14 = tpu.matmul %13, %11, %cst_12 {dimension_numbers = #tpu.dot_dimension_numbers<[1], [0], [0], [1], [0, 0, 1, 1], [], []>} : vector<8x4xf32>, vector<4x128xf32>, vector<8x128xf32> -> vector<8x128xf32>
    %15 = arith.addf %5, %14 : vector<8x128xf32>
    %cst_13 = arith.constant dense<0.000000e+00> : vector<4x128xf32>
    %16 = tpu.matmul %11, %2, %cst_13 {dimension_numbers = #tpu.dot_dimension_numbers<[1], [0], [0], [1], [0, 0, 1, 1], [], []>} : vector<4x128xf32>, vector<128x128xf32>, vector<4x128xf32> -> vector<4x128xf32>
    %cst_14 = arith.constant 5.000000e-02 : f32
    %17 = vector.broadcast %cst_14 : f32 to vector<4x128xf32>
    %18 = arith.mulf %17, %1 : vector<4x128xf32>
    %cst_15 = arith.constant 0.949999988 : f32
    %19 = vector.broadcast %cst_15 : f32 to vector<4x128xf32>
    %20 = arith.mulf %19, %16 : vector<4x128xf32>
    %21 = arith.addf %18, %20 : vector<4x128xf32>
    %c2 = arith.constant 2 : index
    %c0_16 = arith.constant 0 : index
    %c0_17 = arith.constant 0 : index
    %22 = vector.load %arg3[%c2, %c0_16, %c0_17] : memref<3x8x4xf32, #tpu.memory_space<vmem>>, vector<1x8x4xf32>
    %23 = vector.shape_cast %22 : vector<1x8x4xf32> to vector<8x4xf32>
    %cst_18 = arith.constant dense<0.000000e+00> : vector<8x128xf32>
    %24 = tpu.matmul %23, %21, %cst_18 {dimension_numbers = #tpu.dot_dimension_numbers<[1], [0], [0], [1], [0, 0, 1, 1], [], []>} : vector<8x4xf32>, vector<4x128xf32>, vector<8x128xf32> -> vector<8x128xf32>
    %25 = arith.addf %15, %24 : vector<8x128xf32>
    %c0_19 = arith.constant 0 : index
    %c0_20 = arith.constant 0 : index
    %26 = vector.load %arg4[%c0_19, %c0_20] : memref<8x1xf32, #tpu.memory_space<vmem>>, vector<8x1xf32>
    %27 = vector.broadcast %26 : vector<8x1xf32> to vector<8x128xf32>
    %28 = arith.addf %25, %27 : vector<8x128xf32>
    %c0_21 = arith.constant 0 : index
    %c0_22 = arith.constant 0 : index
    %c0_23 = arith.constant 0 : index
    %29 = vector.load %arg5[%c0_21, %c0_22, %c0_23] : memref<1x8x128xf32, #tpu.memory_space<vmem>>, vector<1x8x128xf32>
    %30 = vector.shape_cast %29 : vector<1x8x128xf32> to vector<8x128xf32>
    %31 = vector.shape_cast %28 : vector<8x128xf32> to vector<1x8x128xf32>
    tpu.vector_store %arg5[%c0_21, %c0_22, %c0_23], %31 {strides = array<i32>} : memref<1x8x128xf32, #tpu.memory_space<vmem>>, vector<1x8x128xf32>,
    return
  }
  func.func @transform_0(%arg0: i32) -> (i32, i32, i32) {
    %c0_i32 = arith.constant 0 : i32
    %c0_i32_0 = arith.constant 0 : i32
    %c0_i32_1 = arith.constant 0 : i32
    return %arg0, %c0_i32, %c0_i32_0 : i32, i32, i32
  }
  func.func @transform_1(%arg0: i32) -> (i32, i32) {
    %c0_i32 = arith.constant 0 : i32
    %c0_i32_0 = arith.constant 0 : i32
    %c0_i32_1 = arith.constant 0 : i32
    return %c0_i32, %c0_i32_0 : i32, i32
  }
  func.func @transform_2(%arg0: i32) -> (i32, i32, i32) {
    %c0_i32 = arith.constant 0 : i32
    %c0_i32_0 = arith.constant 0 : i32
    %c0_i32_1 = arith.constant 0 : i32
    %c0_i32_2 = arith.constant 0 : i32
    return %c0_i32, %c0_i32_0, %c0_i32_1 : i32, i32, i32
  }
  func.func @transform_3(%arg0: i32) -> (i32, i32) {
    %c0_i32 = arith.constant 0 : i32
    %c0_i32_0 = arith.constant 0 : i32
    %c0_i32_1 = arith.constant 0 : i32
    return %c0_i32, %c0_i32_0 : i32, i32
  }
  func.func @transform_4(%arg0: i32) -> (i32, i32, i32) {
    %c0_i32 = arith.constant 0 : i32
    %c0_i32_0 = arith.constant 0 : i32
    %c0_i32_1 = arith.constant 0 : i32
    return %arg0, %c0_i32, %c0_i32_0 : i32, i32, i32
  }
}

</mosaic_0001>

<llo_original>
// kernel: mixprop_pallas.1
$region0: #{mixprop_pallas.1}
  #allocation0 [shape = 'u32[]', space=smem, size = 0x4, offset = 0x4, fixed_abs, tag = 'smem constant byte address 0x4 - core index']
  #allocation1 [shape = 'u32[144,128]{1,0:T(1,128)}', space=vmem, size = 0x12000, scoped, tag = 'internal scratch']
  %s0 = inlined_call_operand.vmem [shape: f32[2,4,128], index: 0, kind: input, shape index: {}]
  %s1 = inlined_call_operand.vmem [shape: f32[128,128], index: 1, kind: input, shape index: {}]
  %s2 = inlined_call_operand.vmem [shape: f32[3,8,4], index: 2, kind: input, shape index: {}]
  %s3 = inlined_call_operand.vmem [shape: f32[8,1], index: 3, kind: input, shape index: {}]
  %s4 = inlined_call_operand.vmem [shape: f32[2,8,128], index: 4, kind: output, shape index: {}]
  %s5 = sld [smem:[#allocation0]]
  $region49: #{mixprop_pallas.1} parent=0
    _
  %s7 = ssub.s32 1, %s5
  %s8 = scalar_select 0, %s7, %s5
  loop: start=0, step=1, limit=4
  $region2: #{mixprop_pallas.1} parent=0 // loop_pre_header
    _
  $region3: #{mixprop_pallas.1} parent=0 // loop_header
    %s10 = sphi 0, %s14
    %p11 = scmp.ge.s32.totalorder %s10, 4
    %s20 = sphi 0, %s22
    %s23 = sphi 0, %s20
    %s24 = sphi 0, %s23
    %s40 = sphi 0, %s24
    %s44 = sphi 0, %s44
    %s46 = sphi 0, %s44
    %s47 = sphi 0, %s46
    %s61 = sphi 0, %s47
    %s65 = sphi 0, %s65
    %s67 = sphi 0, %s65
    %s68 = sphi 0, %s67
    %s82 = sphi 0, %s68
    %s86 = sphi 0, %s86
    %s88 = sphi 0, %s86
    %s89 = sphi 0, %s88
    %s103 = sphi 0, %s89
    %s109 = sphi 0, %s111
    %s112 = sphi 0, %s109
    %s113 = sphi 0, %s112
    %s129 = sphi 0, %s113
  $region4: #{mixprop_pallas.1} parent=0 // loop_header_branch
    %13 = sbr.rel (%p11) target = $region8
  $region5: #{mixprop_pallas.1} parent=0 // loop_body
    %s15 = ssub.s32 %s10, 1
    %s16 = ssub.s32 %s10, 2
    %s17 = sadd.s32 %s10, 1
    %s18 = ssub.s32 %s10, %s17
    %p19 = scmp.eq.s32.totalorder %s18, 0
    %s21 = sadd.s32 %s20, 1
    %s22 = scalar_select %p19, %s20, %s21
    %p25 = pneg %p19
    %p26 = scmp.eq.s32.totalorder %s10, 1
    %p27 = por %p25, %p26
    %p28 = scmp.ne.s32.totalorder %s20, %s23
    %p29 = scmp.eq.s32.totalorder %s10, 0
    %p30 = por %p28, %p29
    %p31 = scmp.ne.s32.totalorder %s20, %s23
    %p32 = scmp.eq.s32.totalorder %s15, 1
    %p33 = por %p31, %p32
    %p34 = scmp.ne.s32.totalorder %s23, %s24
    %p35 = scmp.eq.s32.totalorder %s15, 0
    %p36 = por %p34, %p35
    %p37 = scmp.ne.s32.totalorder %s23, %s24
    %p38 = scmp.eq.s32.totalorder %s16, 1
    %p39 = por %p37, %p38
    %p41 = scmp.ne.s32.totalorder %s24, %s40
    %p42 = scmp.eq.s32.totalorder %s16, 0
    %p43 = por %p41, %p42
    %s45 = sadd.s32 %s44, 1
    %p48 = scmp.eq.s32.totalorder %s10, 1
    %p49 = scmp.ne.s32.totalorder %s44, %s46
    %p50 = scmp.eq.s32.totalorder %s10, 0
    %p51 = por %p49, %p50
    %p52 = scmp.ne.s32.totalorder %s44, %s46
    %p53 = scmp.eq.s32.totalorder %s15, 1
    %p54 = por %p52, %p53
    %p55 = scmp.ne.s32.totalorder %s46, %s47
    %p56 = scmp.eq.s32.totalorder %s15, 0
    %p57 = por %p55, %p56
    %p58 = scmp.ne.s32.totalorder %s46, %s47
    %p59 = scmp.eq.s32.totalorder %s16, 1
    %p60 = por %p58, %p59
    %p62 = scmp.ne.s32.totalorder %s47, %s61
    %p63 = scmp.eq.s32.totalorder %s16, 0
    %p64 = por %p62, %p63
    %s66 = sadd.s32 %s65, 1
    %p69 = scmp.eq.s32.totalorder %s10, 1
    %p70 = scmp.ne.s32.totalorder %s65, %s67
    %p71 = scmp.eq.s32.totalorder %s10, 0
    %p72 = por %p70, %p71
    %p73 = scmp.ne.s32.totalorder %s65, %s67
    %p74 = scmp.eq.s32.totalorder %s15, 1
    %p75 = por %p73, %p74
    %p76 = scmp.ne.s32.totalorder %s67, %s68
    %p77 = scmp.eq.s32.totalorder %s15, 0
    %p78 = por %p76, %p77
    %p79 = scmp.ne.s32.totalorder %s67, %s68
    %p80 = scmp.eq.s32.totalorder %s16, 1
    %p81 = por %p79, %p80
    %p83 = scmp.ne.s32.totalorder %s68, %s82
    %p84 = scmp.eq.s32.totalorder %s16, 0
    %p85 = por %p83, %p84
    %s87 = sadd.s32 %s86, 1
    %p90 = scmp.eq.s32.totalorder %s10, 1
    %p91 = scmp.ne.s32.totalorder %s86, %s88
    %p92 = scmp.eq.s32.totalorder %s10, 0
    %p93 = por %p91, %p92
    %p94 = scmp.ne.s32.totalorder %s86, %s88
    %p95 = scmp.eq.s32.totalorder %s15, 1
    %p96 = por %p94, %p95
    %p97 = scmp.ne.s32.totalorder %s88, %s89
    %p98 = scmp.eq.s32.totalorder %s15, 0
    %p99 = por %p97, %p98
    %p100 = scmp.ne.s32.totalorder %s88, %s89
    %p101 = scmp.eq.s32.totalorder %s16, 1
    %p102 = por %p100, %p101
    %p104 = scmp.ne.s32.totalorder %s89, %s103
    %p105 = scmp.eq.s32.totalorder %s16, 0
    %p106 = por %p104, %p105
    %s107 = ssub.s32 %s10, %s17
    %p108 = scmp.eq.s32.totalorder %s107, 0
    %s110 = sadd.s32 %s109, 1
    %s111 = scalar_select %p108, %s109, %s110
    %p114 = pneg %p108
    %p115 = scmp.eq.s32.totalorder %s10, 1
    %p116 = por %p114, %p115
    %p117 = scmp.ne.s32.totalorder %s109, %s112
    %p118 = scmp.eq.s32.totalorder %s10, 0
    %p119 = por %p117, %p118
    %p120 = scmp.ne.s32.totalorder %s109, %s112
    %p121 = scmp.eq.s32.totalorder %s15, 1
    %p122 = por %p120, %p121
    %p123 = scmp.ne.s32.totalorder %s112, %s113
    %p124 = scmp.eq.s32.totalorder %s15, 0
    %p125 = por %p123, %p124
    %p126 = scmp.ne.s32.totalorder %s112, %s113
    %p127 = scmp.eq.s32.totalorder %s16, 1
    %p128 = por %p126, %p127
    %p130 = scmp.ne.s32.totalorder %s113, %s129
    %p131 = scmp.eq.s32.totalorder %s16, 0
    %p132 = por %p130, %p131
    %p133 = scmp.le.s32.totalorder 1, %s10
    %p134 = scmp.lt.s32.totalorder %s10, 3
    %p135 = pnand %p133, %p134
    %p136 = pneg %p135
    // Predicated region
    $region9: #{mixprop_pallas.1} parent=5 // pred_check
      _
    $region10: #{mixprop_pallas.1} parent=5 // pred_check_branch
      %138 = sbr.rel (%p135) target = $region12
    $region11: #{mixprop_pallas.1} parent=5 // pred_region
      %s139 = ssub.s32 %s10, 1
      // Predicated region
      $region13: #{mixprop_pallas.1} parent=11 // pred_check
        %p140 = pneg %p57
      $region14: #{mixprop_pallas.1} parent=11 // pred_check_branch
        %142 = sbr.rel (%p140) target = $region16
      $region15: #{mixprop_pallas.1} parent=11 // pred_region
        _
      $region16: #{mixprop_pallas.1} parent=11 // pred_fallthru
        _
      // Predicated region
      $region17: #{mixprop_pallas.1} parent=11 // pred_check
        %p143 = pneg %p78
      $region18: #{mixprop_pallas.1} parent=11 // pred_check_branch
        %145 = sbr.rel (%p143) target = $region20
      $region19: #{mixprop_pallas.1} parent=11 // pred_region
        _
      $region20: #{mixprop_pallas.1} parent=11 // pred_fallthru
        _
      // Predicated region
      $region21: #{mixprop_pallas.1} parent=11 // pred_check
        %p146 = pneg %p99
      $region22: #{mixprop_pallas.1} parent=11 // pred_check_branch
        %148 = sbr.rel (%p146) target = $region24
      $region23: #{mixprop_pallas.1} parent=11 // pred_region
        _
      $region24: #{mixprop_pallas.1} parent=11 // pred_fallthru
        _
    $region12: #{mixprop_pallas.1} parent=5 // pred_fallthru
      _
    %p149 = scmp.lt.s32.totalorder %s10, 2
    // Predicated region
    $region25: #{mixprop_pallas.1} parent=5 // pred_check
      %p150 = pneg %p149
    $region26: #{mixprop_pallas.1} parent=5 // pred_check_branch
      %152 = sbr.rel (%p150) target = $region28
    $region27: #{mixprop_pallas.1} parent=5 // pred_region
      // Predicated region
      $region29: #{mixprop_pallas.1} parent=27 // pred_check
        %p153 = pneg %p30
      $region30: #{mixprop_pallas.1} parent=27 // pred_check_branch
        %155 = sbr.rel (%p153) target = $region32
      $region31: #{mixprop_pallas.1} parent=27 // pred_region
        %p156 = scmp.lt.s32.totalorder %s10, 1
        %s157 = scalar_select %p156, %s10, 1
        %s158 = smul.addr %s157, 4
        %s159 = scalar_lea.vmem %s0, %s158
      $region32: #{mixprop_pallas.1} parent=27 // pred_fallthru
        _
    $region28: #{mixprop_pallas.1} parent=5 // pred_fallthru
      _
    %p160 = scmp.le.s32.totalorder 1, %s10
    %p161 = scmp.lt.s32.totalorder %s10, 3
    %p162 = pnand %p160, %p161
    %p163 = pneg %p162
    // Predicated region
    $region33: #{mixprop_pallas.1} parent=5 // pred_check
      _
    $region34: #{mixprop_pallas.1} parent=5 // pred_check_branch
      %165 = sbr.rel (%p162) target = $region36
    $region35: #{mixprop_pallas.1} parent=5 // pred_region
      %s166 = ssub.s32 %s10, 1
      %p167 = scmp.lt.s32.totalorder %s15, 1
      %s168 = scalar_select %p167, %s15, 1
      %s169 = smul.addr %s168, 4
      %s170 = scalar_lea.vmem %s0, %s169
      %p171 = pneg %p36
      %p172 = pneg %p33
      %p173 = pneg %p57
      %p174 = pneg %p54
      %p175 = pneg %p78
      %p176 = pneg %p75
      %p177 = pneg %p99
      %p178 = pneg %p96
      %p179 = pneg %p125
      %p180 = pneg %p122
      %p181 = scmp.lt.s32.totalorder %s15, 1
      %s182 = scalar_select %p181, %s15, 1
      %s183 = smul.addr %s182, 8
      %s184 = scalar_lea.vmem %s4, %s183
      %p185 = scmp.lt.s32.totalorder %s15, 1
      %s186 = scalar_select %p185, %s15, 1
      %s187 = smul.addr %s186, 4
      %s188 = scalar_lea.vmem %s0, %s187
      %p189 = scmp.lt.s32.totalorder %s15, 1
      %s190 = scalar_select %p189, %s15, 1
      %s191 = smul.addr %s190, 8
      %s192 = scalar_lea.vmem %s4, %s191
      %v193 = vld [vmem:[%s188] sm:$0xf]
      %v194 = vld [vmem:[%s1] sm:$0xff]
      %v195 = vld [vmem:[%s1 + $0x8] sm:$0xff]
      %v196 = vld [vmem:[%s1 + $0x10] sm:$0xff]
      %v197 = vld [vmem:[%s1 + $0x18] sm:$0xff]
      %v198 = vld [vmem:[%s1 + $0x20] sm:$0xff]
      %v199 = vld [vmem:[%s1 + $0x28] sm:$0xff]
      %v200 = vld [vmem:[%s1 + $0x30] sm:$0xff]
      %v201 = vld [vmem:[%s1 + $0x38] sm:$0xff]
      %v202 = vld [vmem:[%s1 + $0x40] sm:$0xff]
      %v203 = vld [vmem:[%s1 + $0x48] sm:$0xff]
      %v204 = vld [vmem:[%s1 + $0x50] sm:$0xff]
      %v205 = vld [vmem:[%s1 + $0x58] sm:$0xff]
      %v206 = vld [vmem:[%s1 + $0x60] sm:$0xff]
      %v207 = vld [vmem:[%s1 + $0x68] sm:$0xff]
      %v208 = vld [vmem:[%s1 + $0x70] sm:$0xff]
      %v209 = vld [vmem:[%s1 + $0x78] sm:$0xff]
      %v210 = vld [vmem:[%s2] sm:$0xff]
      %211 = vmatprep.subr.mxu0 0.0
      %212 = vmatpush1.msra.mxu0 %v194
      %213 = vmatprep.subr.mxu0 0.0
      %214 = vmatpush1.msra.mxu0 %v195
      %215 = vmatprep.subr.mxu0 0.0
      %216 = vmatpush1.msra.mxu0 %v196
      %217 = vmatprep.subr.mxu0 0.0
      %218 = vmatpush1.msra.mxu0 %v197
      %219 = vmatprep.subr.mxu0 0.0
      %220 = vmatpush1.msra.mxu0 %v198
      %221 = vmatprep.subr.mxu0 0.0
      %222 = vmatpush1.msra.mxu0 %v199
      %223 = vmatprep.subr.mxu0 0.0
      %224 = vmatpush1.msra.mxu0 %v200
      %225 = vmatprep.subr.mxu0 0.0
      %226 = vmatpush1.msra.mxu0 %v201
      %227 = vmatprep.subr.mxu0 0.0
      %228 = vmatpush1.msra.mxu0 %v202
      %229 = vmatprep.subr.mxu0 0.0
      %230 = vmatpush1.msra.mxu0 %v203
      %231 = vmatprep.subr.mxu0 0.0
      %232 = vmatpush1.msra.mxu0 %v204
      %233 = vmatprep.subr.mxu0 0.0
      %234 = vmatpush1.msra.mxu0 %v205
      %235 = vmatprep.subr.mxu0 0.0
      %236 = vmatpush1.msra.mxu0 %v206
      %237 = vmatprep.subr.mxu0 0.0
      %238 = vmatpush1.msra.mxu0 %v207
      %239 = vmatprep.subr.mxu0 0.0
      %240 = vmatpush1.msra.mxu0 %v208
      %241 = vmatprep.subr.mxu0 0.0
      %242 = vmatpush1.msra.mxu0 %v209
      %243 = vmatprep.subr.mxu0 0.0
      %244 = vmatpush1.msra.mxu0 0.0
      %245 = vmatprep.subr.mxu0 0.0
      %246 = vmatpush1.msra.mxu0 0.0
      %247 = vmatprep.subr.mxu0 0.0
      %248 = vmatpush1.msra.mxu0 0.0
      %249 = vmatprep.subr.mxu0 0.0
      %250 = vmatpush1.msra.mxu0 0.0
      %251 = vmatprep.subr.mxu0 0.0
      %252 = vmatpush1.msra.mxu0 0.0
      %253 = vmatprep.subr.mxu0 0.0
      %254 = vmatpush1.msra.mxu0 0.0
      %255 = vmatprep.subr.mxu0 0.0
      %256 = vmatpush1.msra.mxu0 0.0
      %257 = vmatprep.subr.mxu0 0.0
      %258 = vmatpush1.msra.mxu0 0.0
      %259 = vmatprep.subr.mxu0 0.0
      %260 = vmatpush1.msra.mxu0 0.0
      %261 = vmatprep.subr.mxu0 0.0
      %262 = vmatpush1.msra.mxu0 0.0
      %263 = vmatprep.subr.mxu0 0.0
      %264 = vmatpush1.msra.mxu0 0.0
      %265 = vmatprep.subr.mxu0 0.0
      %266 = vmatpush1.msra.mxu0 0.0
      %267 = vmatprep.subr.mxu0 0.0
      %268 = vmatpush1.msra.mxu0 0.0
      %269 = vmatprep.subr.mxu0 0.0
      %270 = vmatpush1.msra.mxu0 0.0
      %271 = vmatprep.subr.mxu0 0.0
      %272 = vmatpush1.msra.mxu0 0.0
      %273 = vmatprep.subr.mxu0 0.0
      %274 = vmatpush1.msra.mxu0 0.0
      %275 = vmatprep.mubr.f32.mxu0 0.0
      %276 = vmatmul.mubr.f32.gmra.mrb[0].mxu0 %v193
      %v277 = vpop.f32.mrb[0].mxu0
      %v278 = vadd.f32 0.0, %v277
      %v279 = vpop.f32.mrb[0].mxu0
      %280 = vdwg.mxu0
      %v281 = vmul.f32 %v193, 0.05
      %v282 = vmul.f32 %v278, 0.95
      %v283 = vadd.f32 %v281, %v282
      %s284 = scalar_lea.vmem %s2, 8
      %v285 = vld [vmem:[%s284] sm:$0xff]
      %vm286 = vcmask 31744
      %v288 = vsel %vm286, %v285, 0
      %vm290 = vcmask 1043456
      %v292 = vsel %vm290, %v283, 0
      %294 = vmatprep.subr.mxu0 0.0
      %295 = vmatpush1.msra.mxu0 %v292
      %296 = vmatprep.subr.mxu0 0.0
      %297 = vmatpush1.msra.mxu0 0.0
      %298 = vmatprep.subr.mxu0 0.0
      %299 = vmatpush1.msra.mxu0 0.0
      %300 = vmatprep.subr.mxu0 0.0
      %301 = vmatpush1.msra.mxu0 0.0
      %302 = vmatprep.subr.mxu0 0.0
      %303 = vmatpush1.msra.mxu0 0.0
      %304 = vmatprep.subr.mxu0 0.0
      %305 = vmatpush1.msra.mxu0 0.0
      %306 = vmatprep.subr.mxu0 0.0
      %307 = vmatpush1.msra.mxu0 0.0
      %308 = vmatprep.subr.mxu0 0.0
      %309 = vmatpush1.msra.mxu0 0.0
      %310 = vmatprep.subr.mxu0 0.0
      %311 = vmatpush1.msra.mxu0 0.0
      %312 = vmatprep.subr.mxu0 0.0
      %313 = vmatpush1.msra.mxu0 0.0
      %314 = vmatprep.subr.mxu0 0.0
      %315 = vmatpush1.msra.mxu0 0.0
      %316 = vmatprep.subr.mxu0 0.0
      %317 = vmatpush1.msra.mxu0 0.0
      %318 = vmatprep.subr.mxu0 0.0
      %319 = vmatpush1.msra.mxu0 0.0
      %320 = vmatprep.subr.mxu0 0.0
      %321 = vmatpush1.msra.mxu0 0.0
      %322 = vmatprep.subr.mxu0 0.0
      %323 = vmatpush1.msra.mxu0 0.0
      %324 = vmatprep.subr.mxu0 0.0
      %325 = vmatpush1.msra.mxu0 0.0
      %326 = vmatprep.subr.mxu0 0.0
      %327 = vmatpush1.msra.mxu0 0.0
      %328 = vmatprep.subr.mxu0 0.0
      %329 = vmatpush1.msra.mxu0 0.0
      %330 = vmatprep.subr.mxu0 0.0
      %331 = vmatpush1.msra.mxu0 0.0
      %332 = vmatprep.subr.mxu0 0.0
      %333 = vmatpush1.msra.mxu0 0.0
      %334 = vmatprep.subr.mxu0 0.0
      %335 = vmatpush1.msra.mxu0 0.0
      %336 = vmatprep.subr.mxu0 0.0
      %337 = vmatpush1.msra.mxu0 0.0
      %338 = vmatprep.subr.mxu0 0.0
      %339 = vmatpush1.msra.mxu0 0.0
      %340 = vmatprep.subr.mxu0 0.0
      %341 = vmatpush1.msra.mxu0 0.0
      %342 = vmatprep.subr.mxu0 0.0
      %343 = vmatpush1.msra.mxu0 0.0
      %344 = vmatprep.subr.mxu0 0.0
      %345 = vmatpush1.msra.mxu0 0.0
      %346 = vmatprep.subr.mxu0 0.0
      %347 = vmatpush1.msra.mxu0 0.0
      %348 = vmatprep.subr.mxu0 0.0
      %349 = vmatpush1.msra.mxu0 0.0
      %350 = vmatprep.subr.mxu0 0.0
      %351 = vmatpush1.msra.mxu0 0.0
      %352 = vmatprep.subr.mxu0 0.0
      %353 = vmatpush1.msra.mxu0 0.0
      %354 = vmatprep.subr.mxu0 0.0
      %355 = vmatpush1.msra.mxu0 0.0
      %356 = vmatprep.subr.mxu0 0.0
      %357 = vmatpush1.msra.mxu0 0.0
      %358 = vmatprep.mubr.f32.mxu0 0.0
      %359 = vmatmul.mubr.f32.gmra.mrb[0].mxu0 %v288
      %v360 = vpop.f32.mrb[0].mxu0
      %v361 = vadd.f32 0.0, %v360
      %v362 = vpop.f32.mrb[0].mxu0
      %363 = vdwg.mxu0
      %v365 = vsel %vm286, %v210, 0
      %v368 = vsel %vm290, %v193, 0
      %370 = vmatprep.subr.mxu0 0.0
      %371 = vmatpush1.msra.mxu0 %v368
      %372 = vmatprep.subr.mxu0 0.0
      %373 = vmatpush1.msra.mxu0 0.0
      %374 = vmatprep.subr.mxu0 0.0
      %375 = vmatpush1.msra.mxu0 0.0
      %376 = vmatprep.subr.mxu0 0.0
      %377 = vmatpush1.msra.mxu0 0.0
      %378 = vmatprep.subr.mxu0 0.0
      %379 = vmatpush1.msra.mxu0 0.0
      %380 = vmatprep.subr.mxu0 0.0
      %381 = vmatpush1.msra.mxu0 0.0
      %382 = vmatprep.subr.mxu0 0.0
      %383 = vmatpush1.msra.mxu0 0.0
      %384 = vmatprep.subr.mxu0 0.0
      %385 = vmatpush1.msra.mxu0 0.0
      %386 = vmatprep.subr.mxu0 0.0
      %387 = vmatpush1.msra.mxu0 0.0
      %388 = vmatprep.subr.mxu0 0.0
      %389 = vmatpush1.msra.mxu0 0.0
      %390 = vmatprep.subr.mxu0 0.0
      %391 = vmatpush1.msra.mxu0 0.0
      %392 = vmatprep.subr.mxu0 0.0
      %393 = vmatpush1.msra.mxu0 0.0
      %394 = vmatprep.subr.mxu0 0.0
      %395 = vmatpush1.msra.mxu0 0.0
      %396 = vmatprep.subr.mxu0 0.0
      %397 = vmatpush1.msra.mxu0 0.0
      %398 = vmatprep.subr.mxu0 0.0
      %399 = vmatpush1.msra.mxu0 0.0
      %400 = vmatprep.subr.mxu0 0.0
      %401 = vmatpush1.msra.mxu0 0.0
      %402 = vmatprep.subr.mxu0 0.0
      %403 = vmatpush1.msra.mxu0 0.0
      %404 = vmatprep.subr.mxu0 0.0
      %405 = vmatpush1.msra.mxu0 0.0
      %406 = vmatprep.subr.mxu0 0.0
      %407 = vmatpush1.msra.mxu0 0.0
      %408 = vmatprep.subr.mxu0 0.0
      %409 = vmatpush1.msra.mxu0 0.0
      %410 = vmatprep.subr.mxu0 0.0
      %411 = vmatpush1.msra.mxu0 0.0
      %412 = vmatprep.subr.mxu0 0.0
      %413 = vmatpush1.msra.mxu0 0.0
      %414 = vmatprep.subr.mxu0 0.0
      %415 = vmatpush1.msra.mxu0 0.0
      %416 = vmatprep.subr.mxu0 0.0
      %417 = vmatpush1.msra.mxu0 0.0
      %418 = vmatprep.subr.mxu0 0.0
      %419 = vmatpush1.msra.mxu0 0.0
      %420 = vmatprep.subr.mxu0 0.0
      %421 = vmatpush1.msra.mxu0 0.0
      %422 = vmatprep.subr.mxu0 0.0
      %423 = vmatpush1.msra.mxu0 0.0
      %424 = vmatprep.subr.mxu0 0.0
      %425 = vmatpush1.msra.mxu0 0.0
      %426 = vmatprep.subr.mxu0 0.0
      %427 = vmatpush1.msra.mxu0 0.0
      %428 = vmatprep.subr.mxu0 0.0
      %429 = vmatpush1.msra.mxu0 0.0
      %430 = vmatprep.subr.mxu0 0.0
      %431 = vmatpush1.msra.mxu0 0.0
      %432 = vmatprep.subr.mxu0 0.0
      %433 = vmatpush1.msra.mxu0 0.0
      %434 = vmatprep.mubr.f32.mxu0 0.0
      %435 = vmatmul.mubr.f32.gmra.mrb[0].mxu0 %v365
      %v436 = vpop.f32.mrb[0].mxu0
      %v437 = vadd.f32 %v361, %v436
      %v438 = vpop.f32.mrb[0].mxu0
      %439 = vdwg.mxu0
      %440 = vmatprep.subr.mxu0 0.0
      %441 = vmatpush1.msra.mxu0 %v194
      %442 = vmatprep.subr.mxu0 0.0
      %443 = vmatpush1.msra.mxu0 %v195
      %444 = vmatprep.subr.mxu0 0.0
      %445 = vmatpush1.msra.mxu0 %v196
      %446 = vmatprep.subr.mxu0 0.0
      %447 = vmatpush1.msra.mxu0 %v197
      %448 = vmatprep.subr.mxu0 0.0
      %449 = vmatpush1.msra.mxu0 %v198
      %450 = vmatprep.subr.mxu0 0.0
      %451 = vmatpush1.msra.mxu0 %v199
      %452 = vmatprep.subr.mxu0 0.0
      %453 = vmatpush1.msra.mxu0 %v200
      %454 = vmatprep.subr.mxu0 0.0
      %455 = vmatpush1.msra.mxu0 %v201
      %456 = vmatprep.subr.mxu0 0.0
      %457 = vmatpush1.msra.mxu0 %v202
      %458 = vmatprep.subr.mxu0 0.0
      %459 = vmatpush1.msra.mxu0 %v203
      %460 = vmatprep.subr.mxu0 0.0
      %461 = vmatpush1.msra.mxu0 %v204
      %462 = vmatprep.subr.mxu0 0.0
      %463 = vmatpush1.msra.mxu0 %v205
      %464 = vmatprep.subr.mxu0 0.0
      %465 = vmatpush1.msra.mxu0 %v206
      %466 = vmatprep.subr.mxu0 0.0
      %467 = vmatpush1.msra.mxu0 %v207
      %468 = vmatprep.subr.mxu0 0.0
      %469 = vmatpush1.msra.mxu0 %v208
      %470 = vmatprep.subr.mxu0 0.0
      %471 = vmatpush1.msra.mxu0 %v209
      %472 = vmatprep.subr.mxu0 0.0
      %473 = vmatpush1.msra.mxu0 0.0
      %474 = vmatprep.subr.mxu0 0.0
      %475 = vmatpush1.msra.mxu0 0.0
      %476 = vmatprep.subr.mxu0 0.0
      %477 = vmatpush1.msra.mxu0 0.0
      %478 = vmatprep.subr.mxu0 0.0
      %479 = vmatpush1.msra.mxu0 0.0
      %480 = vmatprep.subr.mxu0 0.0
      %481 = vmatpush1.msra.mxu0 0.0
      %482 = vmatprep.subr.mxu0 0.0
      %483 = vmatpush1.msra.mxu0 0.0
      %484 = vmatprep.subr.mxu0 0.0
      %485 = vmatpush1.msra.mxu0 0.0
      %486 = vmatprep.subr.mxu0 0.0
      %487 = vmatpush1.msra.mxu0 0.0
      %488 = vmatprep.subr.mxu0 0.0
      %489 = vmatpush1.msra.mxu0 0.0
      %490 = vmatprep.subr.mxu0 0.0
      %491 = vmatpush1.msra.mxu0 0.0
      %492 = vmatprep.subr.mxu0 0.0
      %493 = vmatpush1.msra.mxu0 0.0
      %494 = vmatprep.subr.mxu0 0.0
      %495 = vmatpush1.msra.mxu0 0.0
      %496 = vmatprep.subr.mxu0 0.0
      %497 = vmatpush1.msra.mxu0 0.0
      %498 = vmatprep.subr.mxu0 0.0
      %499 = vmatpush1.msra.mxu0 0.0
      %500 = vmatprep.subr.mxu0 0.0
      %501 = vmatpush1.msra.mxu0 0.0
      %502 = vmatprep.subr.mxu0 0.0
      %503 = vmatpush1.msra.mxu0 0.0
      %504 = vmatprep.mubr.f32.mxu0 0.0
      %505 = vmatmul.mubr.f32.gmra.mrb[0].mxu0 %v283
      %v506 = vpop.f32.mrb[0].mxu0
      %v507 = vadd.f32 0.0, %v506
      %v508 = vpop.f32.mrb[0].mxu0
      %509 = vdwg.mxu0
      %v510 = vmul.f32 %v507, 0.95
      %v511 = vadd.f32 %v281, %v510
      %s512 = scalar_lea.vmem %s2, 16
      %v513 = vld [vmem:[%s512] sm:$0xff]
      %v515 = vsel %vm286, %v513, 0
      %v518 = vsel %vm290, %v511, 0
      %520 = vmatprep.subr.mxu0 0.0
      %521 = vmatpush1.msra.mxu0 %v518
      %522 = vmatprep.subr.mxu0 0.0
      %523 = vmatpush1.msra.mxu0 0.0
      %524 = vmatprep.subr.mxu0 0.0
      %525 = vmatpush1.msra.mxu0 0.0
      %526 = vmatprep.subr.mxu0 0.0
      %527 = vmatpush1.msra.mxu0 0.0
      %528 = vmatprep.subr.mxu0 0.0
      %529 = vmatpush1.msra.mxu0 0.0
      %530 = vmatprep.subr.mxu0 0.0
      %531 = vmatpush1.msra.mxu0 0.0
      %532 = vmatprep.subr.mxu0 0.0
      %533 = vmatpush1.msra.mxu0 0.0
      %534 = vmatprep.subr.mxu0 0.0
      %535 = vmatpush1.msra.mxu0 0.0
      %536 = vmatprep.subr.mxu0 0.0
      %537 = vmatpush1.msra.mxu0 0.0
      %538 = vmatprep.subr.mxu0 0.0
      %539 = vmatpush1.msra.mxu0 0.0
      %540 = vmatprep.subr.mxu0 0.0
      %541 = vmatpush1.msra.mxu0 0.0
      %542 = vmatprep.subr.mxu0 0.0
      %543 = vmatpush1.msra.mxu0 0.0
      %544 = vmatprep.subr.mxu0 0.0
      %545 = vmatpush1.msra.mxu0 0.0
      %546 = vmatprep.subr.mxu0 0.0
      %547 = vmatpush1.msra.mxu0 0.0
      %548 = vmatprep.subr.mxu0 0.0
      %549 = vmatpush1.msra.mxu0 0.0
      %550 = vmatprep.subr.mxu0 0.0
      %551 = vmatpush1.msra.mxu0 0.0
      %552 = vmatprep.subr.mxu0 0.0
      %553 = vmatpush1.msra.mxu0 0.0
      %554 = vmatprep.subr.mxu0 0.0
      %555 = vmatpush1.msra.mxu0 0.0
      %556 = vmatprep.subr.mxu0 0.0
      %557 = vmatpush1.msra.mxu0 0.0
      %558 = vmatprep.subr.mxu0 0.0
      %559 = vmatpush1.msra.mxu0 0.0
      %560 = vmatprep.subr.mxu0 0.0
      %561 = vmatpush1.msra.mxu0 0.0
      %562 = vmatprep.subr.mxu0 0.0
      %563 = vmatpush1.msra.mxu0 0.0
      %564 = vmatprep.subr.mxu0 0.0
      %565 = vmatpush1.msra.mxu0 0.0
      %566 = vmatprep.subr.mxu0 0.0
      %567 = vmatpush1.msra.mxu0 0.0
      %568 = vmatprep.subr.mxu0 0.0
      %569 = vmatpush1.msra.mxu0 0.0
      %570 = vmatprep.subr.mxu0 0.0
      %571 = vmatpush1.msra.mxu0 0.0
      %572 = vmatprep.subr.mxu0 0.0
      %573 = vmatpush1.msra.mxu0 0.0
      %574 = vmatprep.subr.mxu0 0.0
      %575 = vmatpush1.msra.mxu0 0.0
      %576 = vmatprep.subr.mxu0 0.0
      %577 = vmatpush1.msra.mxu0 0.0
      %578 = vmatprep.subr.mxu0 0.0
      %579 = vmatpush1.msra.mxu0 0.0
      %580 = vmatprep.subr.mxu0 0.0
      %581 = vmatpush1.msra.mxu0 0.0
      %582 = vmatprep.subr.mxu0 0.0
      %583 = vmatpush1.msra.mxu0 0.0
      %584 = vmatprep.mubr.f32.mxu0 0.0
      %585 = vmatmul.mubr.f32.gmra.mrb[0].mxu0 %v515
      %v586 = vpop.f32.mrb[0].mxu0
      %v587 = vadd.f32 0.0, %v586
      %v588 = vpop.f32.mrb[0].mxu0
      %589 = vdwg.mxu0
      %v590 = vadd.f32 %v437, %v587
      %v591 = vld [vmem:[%s3] sm:$0xff]
      %593 = vset.pattern.permute.xlu0 0
      %594 = vperm.xlu0 %593, %v591
      %v595 = vpop.permute.xlu0 %594
      %v597 = vadd.f32 %v590, %v595
      %598 = vst [vmem:[%s192] sm:$0xff] %v597
      %p599 = scmp.lt.s32.totalorder %s15, 1
      %s600 = scalar_select %p599, %s15, 1
      %s601 = smul.addr %s600, 8
      %s602 = scalar_lea.vmem %s4, %s601
      // Predicated region
      $region37: #{mixprop_pallas.1} parent=35 // pred_check
        %p603 = pneg %p122
      $region38: #{mixprop_pallas.1} parent=35 // pred_check_branch
        %605 = sbr.rel (%p603) target = $region40
      $region39: #{mixprop_pallas.1} parent=35 // pred_region
        _
      $region40: #{mixprop_pallas.1} parent=35 // pred_fallthru
        _
    $region36: #{mixprop_pallas.1} parent=5 // pred_fallthru
      _
    %p606 = scmp.le.s32.totalorder 2, %s10
    // Predicated region
    $region41: #{mixprop_pallas.1} parent=5 // pred_check
      %p607 = pneg %p606
    $region42: #{mixprop_pallas.1} parent=5 // pred_check_branch
      %609 = sbr.rel (%p607) target = $region44
    $region43: #{mixprop_pallas.1} parent=5 // pred_region
      %s610 = ssub.s32 %s10, 2
      // Predicated region
      $region45: #{mixprop_pallas.1} parent=43 // pred_check
        %p611 = pneg %p128
      $region46: #{mixprop_pallas.1} parent=43 // pred_check_branch
        %613 = sbr.rel (%p611) target = $region48
      $region47: #{mixprop_pallas.1} parent=43 // pred_region
        %p614 = scmp.lt.s32.totalorder %s16, 1
        %s615 = scalar_select %p614, %s16, 1
        %s616 = smul.addr %s615, 8
        %s617 = scalar_lea.vmem %s4, %s616
      $region48: #{mixprop_pallas.1} parent=43 // pred_fallthru
        _
    $region44: #{mixprop_pallas.1} parent=5 // pred_fallthru
      _
  $region6: #{mixprop_pallas.1} parent=0 // loop_footer
    %s14 = sadd.s32 1, %s10
  $region7: #{mixprop_pallas.1} parent=0 // loop_footer_branch
    %9 = sbr.rel target = $region3
  $region8: #{mixprop_pallas.1} parent=0 // loop_exit
    _

</llo_original>
